<compile_context>
chip_gen: v6e
topology: v6e:2x2x1
jax: 0.10.0
libtpu: 0.0.40
codegen_flags: <defaults>
</compile_context>

<pallas_src>
import functools
import math

import jax
import jax.numpy as jnp
from jax import lax
from jax.experimental import pallas as pl
from jax.experimental.pallas import tpu as pltpu

BN_EPS = 1e-5
LEAKY_SLOPE = 0.02


# ======================================================================
# Pallas kernel: one (batch_block x row_block) output tile per grid step
# ======================================================================
def _conv_bn_act_kernel(*refs, kh_s, kw_s, cin_s, out_w, row_block, n_row_blocks,
                        batch_block, residual, slope, mm_dtype):
    """refs (residual=False): x_ref, w_ref, b_ref, o_ref
       refs (residual=True):  x_ref, w_ref, b_ref, r_ref, o_ref

    x_ref : (batch_block, Hs, Ws*cin_s)  f32/bf16  padded, space-to-depth packed image
    w_ref : (cout, K)                    bf16      K = kh_s*kw_s*cin_s (BN scale folded)
    b_ref : (cout, 1)                    f32       folded conv bias + BN shift
    r_ref : (batch_block, cin, M_blk)    f32       residual = original x, NCHW-flat
    o_ref : (batch_block, cout, M_blk)   f32       M_blk = row_block*out_w (lane dense)
    """
    if residual:
        x_ref, w_ref, b_ref, r_ref, o_ref = refs
    else:
        x_ref, w_ref, b_ref, o_ref = refs
        r_ref = None

    win = row_block + kh_s - 1
    w = w_ref[...]                                  # (cout, K) bf16
    bias = b_ref[...]                               # (cout, 1) f32

    if n_row_blocks == 1:
        row0 = 0                                    # static path (whole image)
    else:
        row0 = pl.multiple_of(pl.program_id(1) * row_block, 8)

    for b in range(batch_block):                    # static unroll: amortize step overhead
        if n_row_blocks == 1:
            win2d = x_ref[b, 0:win, :]
        else:
            win2d = x_ref[b, pl.ds(row0, win), :]   # (win, Ws*cin_s), halo rows included

        # ONE cast + ONE lane-split reshape per window (not per tap / per im2col copy).
        win3d = win2d.astype(mm_dtype).reshape(win, -1, cin_s)      # (win, Ws, cin_s)

        taps = []
        for dy in range(kh_s):                      # stride is always 1 in-kernel
            for dx in range(kw_s):
                taps.append(win3d[dy:dy + row_block, dx:dx + out_w, :])
        patches = jnp.concatenate(taps, axis=-1)                    # (row_block, out_w, K)
        patches = patches.reshape(row_block * out_w, kh_s * kw_s * cin_s)   # (M, K)

        # (cout, K) x (M, K)^T -> (cout, M): spatial is the lane-dense minor dim,
        # which is exactly the NCHW layout returned by the wrapper (free reshape).
        out = lax.dot_general(w, patches, (((1,), (1,)), ((), ())),
                              preferred_element_type=jnp.float32)
        out = out + bias                                            # folded bias / BN affine
        if residual:
            out = out + r_ref[b]                                    # exact f32 residual

        if slope == 0.0:
            out = jnp.maximum(out, 0.0)                             # ReLU fast path
        else:
            out = jnp.where(out > 0, out, slope * out)              # LeakyReLU(0.02)
        o_ref[b] = out.astype(o_ref.dtype)


# ======================================================================
# Wrapper: BN folding, space-to-depth packing, weight repack, pallas_call
# ======================================================================
def conv2d_block(x, conv_w, conv_b, bn_gamma, bn_beta, bn_mean, bn_var, *,
                 stride=1, padding=0, residual=False, leaky=False, eps=BN_EPS,
                 mm_dtype=jnp.bfloat16, x_dtype=jnp.float32,
                 batch_block=1, row_block=None, interpret=False):
    n, cin, in_h, in_w = x.shape
    cout, cin_w, kh, kw = conv_w.shape
    assert cin_w == cin
    s, p = int(stride), int(padding)
    out_h = (in_h + 2 * p - kh) // s + 1
    out_w = (in_w + 2 * p - kw) // s + 1
    assert out_h > 0 and out_w > 0
    if residual:
        assert cin == cout and out_h == in_h and out_w == in_w, \
            "residual requires matching input/output shapes"

    # ---- fold BatchNorm (eval, running stats) + conv bias into weight / one bias col ----
    scale = bn_gamma / jnp.sqrt(bn_var + eps)                        # (cout,)
    w_fold = conv_w * scale[:, None, None, None]                     # (cout,cin,kh,kw)
    b_fold = conv_b * scale + bn_beta - bn_mean * scale              # (cout,)

    # ---- stride handled by space-to-depth: the kernel always runs a stride-1 conv ----
    kh_s = (kh - 1) // s + 1
    kw_s = (kw - 1) // s + 1
    cin_s = s * s * cin
    K = kh_s * kw_s * cin_s

    # Weight slab (cout, K), K ordered (dy, dx, py, px, ci); zero-fill "ghost" taps.
    w_pad = jnp.pad(w_fold, ((0, 0), (0, 0), (0, kh_s * s - kh), (0, kw_s * s - kw)))
    w_mat = w_pad.reshape(cout, cin, kh_s, s, kw_s, s)
    w_mat = jnp.transpose(w_mat, (0, 2, 4, 3, 5, 1)).reshape(cout, K).astype(mm_dtype)
    b_col = b_fold.reshape(cout, 1).astype(jnp.float32)

    # Input: NCHW -> NHWC, zero pad, space-to-depth(stride), collapse (W, C) into lanes.
    hp, wp = in_h + 2 * p, in_w + 2 * p
    h_s = -(-hp // s)
    w_s = -(-wp // s)
    x_nhwc = jnp.transpose(x, (0, 2, 3, 1))
    x_padded = jnp.pad(x_nhwc, ((0, 0), (p, p + h_s * s - hp),
                                (p, p + w_s * s - wp), (0, 0)))
    x_pack = x_padded.reshape(n, h_s, s, w_s, s, cin)
    x_pack = jnp.transpose(x_pack, (0, 1, 3, 2, 4, 5)).reshape(n, h_s, w_s * cin_s)
    x_pack = x_pack.astype(x_dtype)

    # ---- tiling: (batch tiles, output-row tiles), both grid axes parallel ----
    batch_block = max(1, math.gcd(int(batch_block), n))
    if (row_block is None or row_block >= out_h
            or out_h % row_block != 0 or row_block % 8 != 0):
        row_block = out_h                       # whole image per step (static slicing)
    n_row_blocks = out_h // row_block
    m_blk = row_block * out_w
    nb = n // batch_block

    kernel = functools.partial(
        _conv_bn_act_kernel, kh_s=kh_s, kw_s=kw_s, cin_s=cin_s, out_w=out_w,
        row_block=row_block, n_row_blocks=n_row_blocks, batch_block=batch_block,
        residual=residual, slope=(LEAKY_SLOPE if leaky else 0.0), mm_dtype=mm_dtype)

    in_specs = [
        pl.BlockSpec((batch_block, h_s, w_s * cin_s), lambda bi, ri: (bi, 0, 0)),
        pl.BlockSpec((cout, K), lambda bi, ri: (0, 0)),
        pl.BlockSpec((cout, 1), lambda bi, ri: (0, 0)),
    ]
    args = [x_pack, w_mat, b_col]
    if residual:
        # Residual source: original NCHW input flattened -> already (cin, M) per image.
        in_specs.append(pl.BlockSpec((batch_block, cin, m_blk), lambda bi, ri: (bi, 0, ri)))
        args.append(x.reshape(n, cin, in_h * in_w).astype(jnp.float32))
    out_spec = pl.BlockSpec((batch_block, cout, m_blk), lambda bi, ri: (bi, 0, ri))

    # Advisory cost + VMEM budget (re-derived; matters for large images on v7x's 64 MiB).
    flops = 2 * n * out_h * out_w * K * cout
    bytes_accessed = (x_pack.size * jnp.dtype(x_dtype).itemsize + w_mat.size * 2
                      + cout * 4 + n * cout * out_h * out_w * 4
                      + (x.size * 4 if residual else 0))
    itob = jnp.dtype(x_dtype).itemsize
    est_vmem = (2 * batch_block * h_s * max(w_s * cin_s, 128) * itob      # input blk (dbl buf)
                + 2 * batch_block * cout * max(m_blk, 128) * 4            # output blk
                + (2 * batch_block * cin * max(m_blk, 128) * 4 if residual else 0)
                + cout * max(K, 128) * 2
                + 4 * batch_block * m_blk * max(K, 128) * 2)              # im2col + slack
    vmem_limit = None if est_vmem <= 16 * 2 ** 20 else int(min(2 * est_vmem, 64 * 2 ** 20))

    out = pl.pallas_call(
        kernel,
        out_shape=jax.ShapeDtypeStruct((n, cout, out_h * out_w), jnp.float32),
        grid=(nb, n_row_blocks),
        in_specs=in_specs,
        out_specs=out_spec,
        compiler_params=pltpu.CompilerParams(
            dimension_semantics=("parallel", "parallel"),
            vmem_limit_bytes=vmem_limit),
        cost_estimate=pl.CostEstimate(flops=flops, transcendentals=0,
                                      bytes_accessed=int(bytes_accessed)),
        interpret=interpret,
    )(*args)

    # (n, cout, out_h*out_w) is already channel-major: a free reshape yields NCHW.
    return out.reshape(n, cout, out_h, out_w)


# ======================================================================
# Plain-JAX reference (same folded-BN math, same bf16 rounding of matmul operands)
# ======================================================================
def _reference(x, conv_w, conv_b, bn_gamma, bn_beta, bn_mean, bn_var, *,
               stride, padding, residual, leaky, eps=BN_EPS, mm_dtype=jnp.bfloat16):
    scale = bn_gamma / jnp.sqrt(bn_var + eps)
    w_fold = conv_w * scale[:, None, None, None]
    b_fold = conv_b * scale + bn_beta - bn_mean * scale
    xr = x.astype(mm_dtype).astype(jnp.float32)          # kernel rounds matmul operands
    wr = w_fold.astype(mm_dtype).astype(jnp.float32)
    y = lax.conv_general_dilated(
        xr, wr, (stride, stride), [(padding, padding), (padding, padding)],
        dimension_numbers=('NCHW', 'OIHW', 'NCHW'),
        precision=lax.Precision.HIGHEST)
    y = y + b_fold[None, :, None, None]
    if residual:
        y = y + x                                        # kernel residual path is exact f32
    slope = LEAKY_SLOPE if leaky else 0.0
    return jnp.where(y > 0, y, slope * y)


if __name__ == "__main__":
    key = jax.random.PRNGKey(0)
    ks = jax.random.split(key, 9)

    n, cin, h, w = 2, 4, 16, 16
    cout, k = 8, 3

    x1 = jax.random.normal(ks[0], (n, cin, h, w), jnp.float32)
    w1 = jax.random.normal(ks[1], (cout, cin, k, k), jnp.float32) * 0.1
    b1 = jax.random.normal(ks[2], (cout,), jnp.float32) * 0.1
    gamma = 1.0 + 0.1 * jax.random.normal(ks[3], (cout,), jnp.float32)
    beta = 0.1 * jax.random.normal(ks[4], (cout,), jnp.float32)
    mean = 0.1 * jax.random.normal(ks[5], (cout,), jnp.float32)
    var = 0.5 + jax.random.uniform(ks[6], (cout,), jnp.float32)

    # ---- config 1: stride 1, pad 1, ReLU; row-tiled grid (2 batch x 2 row tiles) ----
    out1 = conv2d_block(x1, w1, b1, gamma, beta, mean, var,
                        stride=1, padding=1, residual=False, leaky=False,
                        batch_block=1, row_block=8)
    ref1 = _reference(x1, w1, b1, gamma, beta, mean, var,
                      stride=1, padding=1, residual=False, leaky=False)

    # ---- config 2: residual + LeakyReLU(0.02), cin=cout=8; 2 images per grid step ----
    x2 = jax.random.normal(ks[7], (n, cout, h, w), jnp.float32)
    w2 = jax.random.normal(ks[8], (cout, cout, k, k), jnp.float32) * 0.1
    out2 = conv2d_block(x2, w2, b1, gamma, beta, mean, var,
                        stride=1, padding=1, residual=True, leaky=True,
                        batch_block=2)
    ref2 = _reference(x2, w2, b1, gamma, beta, mean, var,
                      stride=1, padding=1, residual=True, leaky=True)

    # ---- config 3: stride-2 downsample (space-to-depth path), ReLU ----
    out3 = conv2d_block(x1, w1, b1, gamma, beta, mean, var,
                        stride=2, padding=1, residual=False, leaky=False)
    ref3 = _reference(x1, w1, b1, gamma, beta, mean, var,
                      stride=2, padding=1, residual=False, leaky=False)

    jax.block_until_ready((out1, out2, out3))

    assert out1.shape == (n, cout, h, w)
    assert out2.shape == (n, cout, h, w)
    assert out3.shape == (n, cout, h // 2, w // 2)
    for o, r, tag in ((out1, ref1, "cfg1"), (out2, ref2, "cfg2"), (out3, ref3, "cfg3")):
        err = float(jnp.max(jnp.abs(o - r)))
        assert err < 2e-3, f"{tag}: max abs err {err}"
    print("KERNEL_OK")
</pallas_src>

<mosaic_0001>
module attributes {stable_mosaic.version = 11 : i64} {
  func.func @_conv_bn_act_kernel(%arg0: i32, %arg1: i32, %arg2: memref<1x18x72xf32, #tpu.memory_space<vmem>>, %arg3: memref<8x36xbf16, #tpu.memory_space<vmem>>, %arg4: memref<8x1xf32, #tpu.memory_space<vmem>>, %arg5: memref<1x8x128xf32, #tpu.memory_space<vmem>>) attributes {dimension_semantics = [#tpu.dimension_semantics<parallel>, #tpu.dimension_semantics<parallel>], iteration_bounds = array<i64: 2, 2>, scalar_prefetch = 0 : i64, scratch_operands = 0 : i64, tpu.core_type = #tpu.core_type<tc>, window_params = [{transform_indices = @transform_0, window_bounds = array<i64: 1, 18, 72>}, {pipeline_mode = #tpu.pipeline_mode<synchronous>, transform_indices = @transform_1, window_bounds = array<i64: 8, 36>}, {pipeline_mode = #tpu.pipeline_mode<synchronous>, transform_indices = @transform_2, window_bounds = array<i64: 8, 1>}, {transform_indices = @transform_3, window_bounds = array<i64: 1, 8, 128>}]} {
    %c0 = arith.constant 0 : index
    %c0_0 = arith.constant 0 : index
    %0 = vector.load %arg3[%c0, %c0_0] : memref<8x36xbf16, #tpu.memory_space<vmem>>, vector<8x36xbf16>
    %c0_1 = arith.constant 0 : index
    %c0_2 = arith.constant 0 : index
    %1 = vector.load %arg4[%c0_1, %c0_2] : memref<8x1xf32, #tpu.memory_space<vmem>>, vector<8x1xf32>
    %c8_i32 = arith.constant 8 : i32
    %2 = arith.muli %arg1, %c8_i32 : i32
    %3 = tpu.assume_multiple %2, 8 : i32
    %c0_3 = arith.constant 0 : index
    %4 = arith.index_cast %3 : i32 to index
    %c0_4 = arith.constant 0 : index
    %5 = vector.load %arg2[%c0_3, %4, %c0_4] : memref<1x18x72xf32, #tpu.memory_space<vmem>>, vector<1x10x72xf32>
    %6 = vector.shape_cast %5 : vector<1x10x72xf32> to vector<10x72xf32>
    %7 = arith.truncf %6 : vector<10x72xf32> to vector<10x72xbf16>
    %8 = vector.shape_cast %7 : vector<10x72xbf16> to vector<10x18x4xbf16>
    %9 = vector.extract_strided_slice %8 {offsets = [0, 0, 0], sizes = [8, 16, 4], strides = [1, 1, 1]} : vector<10x18x4xbf16> to vector<8x16x4xbf16>
    %10 = vector.extract_strided_slice %8 {offsets = [0, 1, 0], sizes = [8, 16, 4], strides = [1, 1, 1]} : vector<10x18x4xbf16> to vector<8x16x4xbf16>
    %11 = vector.extract_strided_slice %8 {offsets = [0, 2, 0], sizes = [8, 16, 4], strides = [1, 1, 1]} : vector<10x18x4xbf16> to vector<8x16x4xbf16>
    %12 = vector.extract_strided_slice %8 {offsets = [1, 0, 0], sizes = [8, 16, 4], strides = [1, 1, 1]} : vector<10x18x4xbf16> to vector<8x16x4xbf16>
    %13 = vector.extract_strided_slice %8 {offsets = [1, 1, 0], sizes = [8, 16, 4], strides = [1, 1, 1]} : vector<10x18x4xbf16> to vector<8x16x4xbf16>
    %14 = vector.extract_strided_slice %8 {offsets = [1, 2, 0], sizes = [8, 16, 4], strides = [1, 1, 1]} : vector<10x18x4xbf16> to vector<8x16x4xbf16>
    %15 = vector.extract_strided_slice %8 {offsets = [2, 0, 0], sizes = [8, 16, 4], strides = [1, 1, 1]} : vector<10x18x4xbf16> to vector<8x16x4xbf16>
    %16 = vector.extract_strided_slice %8 {offsets = [2, 1, 0], sizes = [8, 16, 4], strides = [1, 1, 1]} : vector<10x18x4xbf16> to vector<8x16x4xbf16>
    %17 = vector.extract_strided_slice %8 {offsets = [2, 2, 0], sizes = [8, 16, 4], strides = [1, 1, 1]} : vector<10x18x4xbf16> to vector<8x16x4xbf16>
    %18 = tpu.concatenate %9, %10, %11, %12, %13, %14, %15, %16, %17 in 2 : vector<8x16x4xbf16>, vector<8x16x4xbf16>, vector<8x16x4xbf16>, vector<8x16x4xbf16>, vector<8x16x4xbf16>, vector<8x16x4xbf16>, vector<8x16x4xbf16>, vector<8x16x4xbf16>, vector<8x16x4xbf16> -> vector<8x16x36xbf16>
    %19 = vector.shape_cast %18 : vector<8x16x36xbf16> to vector<128x36xbf16>
    %cst = arith.constant dense<0.000000e+00> : vector<8x128xf32>
    %20 = tpu.matmul %0, %19, %cst {dimension_numbers = #tpu.dot_dimension_numbers<[1], [1], [0], [0], [0, 0, 1, 0], [], []>} : vector<8x36xbf16>, vector<128x36xbf16>, vector<8x128xf32> -> vector<8x128xf32>
    %21 = vector.broadcast %1 : vector<8x1xf32> to vector<8x128xf32>
    %22 = arith.addf %20, %21 : vector<8x128xf32>
    %cst_5 = arith.constant 0.000000e+00 : f32
    %23 = vector.broadcast %cst_5 : f32 to vector<8x128xf32>
    %24 = arith.maximumf %22, %23 : vector<8x128xf32>
    %c0_6 = arith.constant 0 : index
    %c0_7 = arith.constant 0 : index
    %c0_8 = arith.constant 0 : index
    %25 = vector.load %arg5[%c0_6, %c0_7, %c0_8] : memref<1x8x128xf32, #tpu.memory_space<vmem>>, vector<1x8x128xf32>
    %26 = vector.shape_cast %25 : vector<1x8x128xf32> to vector<8x128xf32>
    %27 = vector.shape_cast %24 : vector<8x128xf32> to vector<1x8x128xf32>
    tpu.vector_store %arg5[%c0_6, %c0_7, %c0_8], %27 {strides = array<i32>} : memref<1x8x128xf32, #tpu.memory_space<vmem>>, vector<1x8x128xf32>,
    return
  }
  func.func @transform_0(%arg0: i32, %arg1: i32) -> (i32, i32, i32) {
    %c0_i32 = arith.constant 0 : i32
    %c0_i32_0 = arith.constant 0 : i32
    %c0_i32_1 = arith.constant 0 : i32
    return %arg0, %c0_i32, %c0_i32_0 : i32, i32, i32
  }
  func.func @transform_1(%arg0: i32, %arg1: i32) -> (i32, i32) {
    %c0_i32 = arith.constant 0 : i32
    %c0_i32_0 = arith.constant 0 : i32
    %c0_i32_1 = arith.constant 0 : i32
    return %c0_i32, %c0_i32_0 : i32, i32
  }
  func.func @transform_2(%arg0: i32, %arg1: i32) -> (i32, i32) {
    %c0_i32 = arith.constant 0 : i32
    %c0_i32_0 = arith.constant 0 : i32
    %c0_i32_1 = arith.constant 0 : i32
    return %c0_i32, %c0_i32_0 : i32, i32
  }
  func.func @transform_3(%arg0: i32, %arg1: i32) -> (i32, i32, i32) {
    %c0_i32 = arith.constant 0 : i32
    %c0_i32_0 = arith.constant 0 : i32
    return %arg0, %c0_i32, %arg1 : i32, i32, i32
  }
}

</mosaic_0001>

<llo_original>
// kernel: tpu_custom_call.1
$region0: #{tpu_custom_call.1}
  #allocation0 [shape = 'u32[]', space=smem, size = 0x4, offset = 0x4, fixed_abs, tag = 'smem constant byte address 0x4 - core index']
  #allocation1 [shape = 'u32[144,128]{1,0:T(1,128)}', space=vmem, size = 0x12000, scoped, tag = 'internal scratch']
  %s0 = inlined_call_operand.vmem [shape: f32[2,18,72], index: 0, kind: input, shape index: {}]
  %s1 = inlined_call_operand.vmem [shape: bf16[8,36], index: 1, kind: input, shape index: {}]
  %s2 = inlined_call_operand.vmem [shape: f32[8,1], index: 2, kind: input, shape index: {}]
  %s3 = inlined_call_operand.hbm [shape: f32[2,8,256], index: 3, kind: output, shape index: {}]
  %s4 = sld [smem:[#allocation0]]
  $region45: #{tpu_custom_call.1} parent=0
    _
  %s6 = ssub.s32 1, %s4
  %s7 = scalar_select 0, %s6, %s4
  $region1: #{tpu_custom_call.1} parent=0
    #allocation2 [shape = 'u8[8192]{0}', space=vmem, size = 0x2000, scoped, tag = 'output window, operand 0']
    #allocation3 [shape = 's32[2]{0}', space=sflag, size = 0x8, scoped, tag = 'scoped memory for tpu_custom_call.1']
    %8 = vsyncpa [#allocation3], 0
    %s9 = scalar_lea.sflag [#allocation3], 1
    %10 = vsyncpa %s9, 0
    loop: start=0, step=1, limit=6
    $region2: #{tpu_custom_call.1} parent=1 // loop_pre_header
      _
    $region3: #{tpu_custom_call.1} parent=1 // loop_header
      %s12 = sphi 0, %s16
      %p13 = scmp.ge.s32.totalorder %s12, 6
      %s19 = sphi 0, %s31
      %s20 = sphi 0, %s27
      %s21 = sphi 0, %s19
      %s22 = sphi 0, %s20
      %s23 = sphi 0, %s21
      %s24 = sphi 0, %s22
      %s34 = sphi 0, %s36
      %s37 = sphi 0, %s34
      %s38 = sphi 0, %s37
      %s54 = sphi 0, %s38
      %s58 = sphi 0, %s58
      %s60 = sphi 0, %s58
      %s61 = sphi 0, %s60
      %s75 = sphi 0, %s61
      %s79 = sphi 0, %s79
      %s81 = sphi 0, %s79
      %s82 = sphi 0, %s81
      %s96 = sphi 0, %s82
      %s104 = sphi 0, %s106
      %s107 = sphi 0, %s104
      %s108 = sphi 0, %s107
      %s124 = sphi 0, %s108
    $region4: #{tpu_custom_call.1} parent=1 // loop_header_branch
      %15 = sbr.rel (%p13) target = $region8
    $region5: #{tpu_custom_call.1} parent=1 // loop_body
      %s17 = ssub.s32 %s12, 1
      %s18 = ssub.s32 %s12, 2
      %s25 = sadd.s32 1, %s20
      %p26 = scmp.ge.s32.totalorder %s25, 2
      %s27 = scalar_select %p26, 0, %s25
      %s28 = sadd.s32 1, %s19
      %s29 = scalar_select %p26, %s28, %s19
      %p30 = scmp.ge.s32.totalorder %s29, 2
      %s31 = scalar_select %p30, 0, %s29
      %s32 = ssub.s32 %s19, %s31
      %p33 = scmp.eq.s32.totalorder %s32, 0
      %s35 = sadd.s32 %s34, 1
      %s36 = scalar_select %p33, %s34, %s35
      %p39 = pneg %p33
      %p40 = scmp.eq.s32.totalorder %s12, 3
      %p41 = por %p39, %p40
      %p42 = scmp.ne.s32.totalorder %s34, %s37
      %p43 = scmp.eq.s32.totalorder %s12, 0
      %p44 = por %p42, %p43
      %p45 = scmp.ne.s32.totalorder %s34, %s37
      %p46 = scmp.eq.s32.totalorder %s17, 3
      %p47 = por %p45, %p46
      %p48 = scmp.ne.s32.totalorder %s37, %s38
      %p49 = scmp.eq.s32.totalorder %s17, 0
      %p50 = por %p48, %p49
      %p51 = scmp.ne.s32.totalorder %s37, %s38
      %p52 = scmp.eq.s32.totalorder %s18, 3
      %p53 = por %p51, %p52
      %p55 = scmp.ne.s32.totalorder %s38, %s54
      %p56 = scmp.eq.s32.totalorder %s18, 0
      %p57 = por %p55, %p56
      %s59 = sadd.s32 %s58, 1
      %p62 = scmp.eq.s32.totalorder %s12, 3
      %p63 = scmp.ne.s32.totalorder %s58, %s60
      %p64 = scmp.eq.s32.totalorder %s12, 0
      %p65 = por %p63, %p64
      %p66 = scmp.ne.s32.totalorder %s58, %s60
      %p67 = scmp.eq.s32.totalorder %s17, 3
      %p68 = por %p66, %p67
      %p69 = scmp.ne.s32.totalorder %s60, %s61
      %p70 = scmp.eq.s32.totalorder %s17, 0
      %p71 = por %p69, %p70
      %p72 = scmp.ne.s32.totalorder %s60, %s61
      %p73 = scmp.eq.s32.totalorder %s18, 3
      %p74 = por %p72, %p73
      %p76 = scmp.ne.s32.totalorder %s61, %s75
      %p77 = scmp.eq.s32.totalorder %s18, 0
      %p78 = por %p76, %p77
      %s80 = sadd.s32 %s79, 1
      %p83 = scmp.eq.s32.totalorder %s12, 3
      %p84 = scmp.ne.s32.totalorder %s79, %s81
      %p85 = scmp.eq.s32.totalorder %s12, 0
      %p86 = por %p84, %p85
      %p87 = scmp.ne.s32.totalorder %s79, %s81
      %p88 = scmp.eq.s32.totalorder %s17, 3
      %p89 = por %p87, %p88
      %p90 = scmp.ne.s32.totalorder %s81, %s82
      %p91 = scmp.eq.s32.totalorder %s17, 0
      %p92 = por %p90, %p91
      %p93 = scmp.ne.s32.totalorder %s81, %s82
      %p94 = scmp.eq.s32.totalorder %s18, 3
      %p95 = por %p93, %p94
      %p97 = scmp.ne.s32.totalorder %s82, %s96
      %p98 = scmp.eq.s32.totalorder %s18, 0
      %p99 = por %p97, %p98
      %s100 = ssub.s32 %s19, %s31
      %s101 = ssub.s32 %s20, %s27
      %s102 = sor.u32 %s100, %s101
      %p103 = scmp.eq.s32.totalorder %s102, 0
      %s105 = sadd.s32 %s104, 1
      %s106 = scalar_select %p103, %s104, %s105
      %p109 = pneg %p103
      %p110 = scmp.eq.s32.totalorder %s12, 3
      %p111 = por %p109, %p110
      %p112 = scmp.ne.s32.totalorder %s104, %s107
      %p113 = scmp.eq.s32.totalorder %s12, 0
      %p114 = por %p112, %p113
      %p115 = scmp.ne.s32.totalorder %s104, %s107
      %p116 = scmp.eq.s32.totalorder %s17, 3
      %p117 = por %p115, %p116
      %p118 = scmp.ne.s32.totalorder %s107, %s108
      %p119 = scmp.eq.s32.totalorder %s17, 0
      %p120 = por %p118, %p119
      %p121 = scmp.ne.s32.totalorder %s107, %s108
      %p122 = scmp.eq.s32.totalorder %s18, 3
      %p123 = por %p121, %p122
      %p125 = scmp.ne.s32.totalorder %s108, %s124
      %p126 = scmp.eq.s32.totalorder %s18, 0
      %p127 = por %p125, %p126
      %p128 = scmp.le.s32.totalorder 1, %s12
      %p129 = scmp.lt.s32.totalorder %s12, 5
      %p130 = pnand %p128, %p129
      %p131 = pneg %p130
      // Predicated region
      $region9: #{tpu_custom_call.1} parent=5 // pred_check
        _
      $region10: #{tpu_custom_call.1} parent=5 // pred_check_branch
        %133 = sbr.rel (%p130) target = $region12
      $region11: #{tpu_custom_call.1} parent=5 // pred_region
        %s134 = ssub.s32 %s12, 1
        // Predicated region
        $region13: #{tpu_custom_call.1} parent=11 // pred_check
          %p135 = pneg %p71
        $region14: #{tpu_custom_call.1} parent=11 // pred_check_branch
          %137 = sbr.rel (%p135) target = $region16
        $region15: #{tpu_custom_call.1} parent=11 // pred_region
          _
        $region16: #{tpu_custom_call.1} parent=11 // pred_fallthru
          _
        // Predicated region
        $region17: #{tpu_custom_call.1} parent=11 // pred_check
          %p138 = pneg %p92
        $region18: #{tpu_custom_call.1} parent=11 // pred_check_branch
          %140 = sbr.rel (%p138) target = $region20
        $region19: #{tpu_custom_call.1} parent=11 // pred_region
          _
        $region20: #{tpu_custom_call.1} parent=11 // pred_fallthru
          _
      $region12: #{tpu_custom_call.1} parent=5 // pred_fallthru
        _
      %p141 = scmp.lt.s32.totalorder %s12, 4
      // Predicated region
      $region21: #{tpu_custom_call.1} parent=5 // pred_check
        %p142 = pneg %p141
      $region22: #{tpu_custom_call.1} parent=5 // pred_check_branch
        %144 = sbr.rel (%p142) target = $region24
      $region23: #{tpu_custom_call.1} parent=5 // pred_region
        // Predicated region
        $region25: #{tpu_custom_call.1} parent=23 // pred_check
          %p145 = pneg %p44
        $region26: #{tpu_custom_call.1} parent=23 // pred_check_branch
          %147 = sbr.rel (%p145) target = $region28
        $region27: #{tpu_custom_call.1} parent=23 // pred_region
          %p148 = scmp.lt.s32.totalorder %s19, 1
          %s149 = scalar_select %p148, %s19, 1
          %s150 = smul.addr %s149, 3
          %s151 = smul.addr %s150, 8
          %s152 = scalar_lea.vmem %s0, %s151
        $region28: #{tpu_custom_call.1} parent=23 // pred_fallthru
          _
      $region24: #{tpu_custom_call.1} parent=5 // pred_fallthru
        _
      %p153 = scmp.le.s32.totalorder 1, %s12
      %p154 = scmp.lt.s32.totalorder %s12, 5
      %p155 = pnand %p153, %p154
      %p156 = pneg %p155
      // Predicated region
      $region29: #{tpu_custom_call.1} parent=5 // pred_check
        _
      $region30: #{tpu_custom_call.1} parent=5 // pred_check_branch
        %158 = sbr.rel (%p155) target = $region32
      $region31: #{tpu_custom_call.1} parent=5 // pred_region
        %s159 = ssub.s32 %s12, 1
        %p160 = scmp.lt.s32.totalorder %s21, 1
        %s161 = scalar_select %p160, %s21, 1
        %s162 = smul.addr %s161, 3
        %s163 = smul.addr %s162, 8
        %s164 = scalar_lea.vmem %s0, %s163
        %p165 = pneg %p50
        %p166 = pneg %p47
        %p167 = pneg %p71
        %p168 = pneg %p68
        %p169 = pneg %p92
        %p170 = pneg %p89
        %p171 = pneg %p120
        %p172 = pneg %p117
        %s173 = sand.u32 %s107, 1
        %s174 = scalar_lea.sflag [#allocation3], %s173
        %s175 = sand.u32 %s107, 1
        %s176 = smul.addr %s175, 8
        %s177 = scalar_lea.vmem [#allocation2], %s176
        %p178 = scmp.lt.s32.totalorder %s21, 1
        %s179 = scalar_select %p178, %s21, 1
        %s180 = smul.addr %s179, 3
        %s181 = smul.addr %s180, 8
        %s182 = scalar_lea.vmem %s0, %s181
        %v184 = vld [vmem:[%s1] sm:$0xf]
        %v185 = vld [vmem:[%s2] sm:$0xff]
        %s186 = smul.u32 %s22, 8
        %s187 = scalar_lea.vmem %s182, %s186
        %v188 = vld [vmem:[%s187] sm:$0xff]
        %v189 = vld [vmem:[%s187 + $0x8] sm:$0x3]
        %v190 = vpack.c.bf16 %v189, %v188
        %192 = vrot.lane.b32.xlu0 %v190, 124
        %v193 = vpop.permute.xlu0 %192
        %195 = vrot.lane.b32.xlu0 %v190, 120
        %v196 = vpop.permute.xlu0 %195
        %198 = vrot.lane.b32.xlu0 %v190, 116
        %v199 = vpop.permute.xlu0 %198
        %201 = vrot.lane.b32.xlu0 %v190, 112
        %v202 = vpop.permute.xlu0 %201
        %204 = vrot.lane.b32.xlu0 %v190, 108
        %v205 = vpop.permute.xlu0 %204
        %207 = vrot.lane.b32.xlu0 %v190, 104
        %v208 = vpop.permute.xlu0 %207
        %210 = vrot.lane.b32.xlu0 %v190, 100
        %v211 = vpop.permute.xlu0 %210
        %213 = vrot.lane.b32.xlu0 %v190, 96
        %v214 = vpop.permute.xlu0 %213
        %216 = vrot.lane.b32.xlu0 %v190, 92
        %v217 = vpop.permute.xlu0 %216
        %219 = vrot.lane.b32.xlu0 %v190, 88
        %v220 = vpop.permute.xlu0 %219
        %222 = vrot.lane.b32.xlu0 %v190, 84
        %v223 = vpop.permute.xlu0 %222
        %225 = vrot.lane.b32.xlu0 %v190, 80
        %v226 = vpop.permute.xlu0 %225
        %228 = vrot.lane.b32.xlu0 %v190, 76
        %v229 = vpop.permute.xlu0 %228
        %231 = vrot.lane.b32.xlu0 %v190, 72
        %v232 = vpop.permute.xlu0 %231
        %234 = vrot.lane.b32.xlu0 %v190, 68
        %v235 = vpop.permute.xlu0 %234
        %237 = vrot.lane.b32.xlu0 %v190, 64
        %v238 = vpop.permute.xlu0 %237
        %240 = vrot.lane.b32.xlu0 %v190, 60
        %v241 = vpop.permute.xlu0 %240
        %v243 = vcombine.low %v190, %v202
        %v244 = vcombine.high %v190, %v202
        %v246 = vunpack.c.l.s4 1983009808
        %v247 = vunpack.c.0.s8 %v246
        %v248 = vlaneseq
        %v249 = vshrl.u32 %v248, 7
        %v250 = vsub.s32 %v247, %v249
        %v251 = vrot.slane %v243, %v250
        %v253 = vunpack.c.l.s4 1983009808
        %v254 = vunpack.c.0.s8 %v253
        %v255 = vlaneseq
        %v256 = vshrl.u32 %v255, 7
        %v257 = vsub.s32 %v254, %v256
        %v258 = vrot.slane %v244, %v257
        %v259 = vcombine.low %v196, %v208
        %v260 = vcombine.high %v196, %v208
        %v262 = vunpack.c.l.s4 1983009808
        %v263 = vunpack.c.0.s8 %v262
        %v264 = vlaneseq
        %v265 = vshrl.u32 %v264, 7
        %v266 = vsub.s32 %v263, %v265
        %v267 = vrot.slane %v259, %v266
        %v269 = vunpack.c.l.s4 1983009808
        %v270 = vunpack.c.0.s8 %v269
        %v271 = vlaneseq
        %v272 = vshrl.u32 %v271, 7
        %v273 = vsub.s32 %v270, %v272
        %v274 = vrot.slane %v260, %v273
        %v275 = vcombine.low %v214, %v226
        %v276 = vcombine.high %v214, %v226
        %v278 = vunpack.c.l.s4 1983009808
        %v279 = vunpack.c.0.s8 %v278
        %v280 = vlaneseq
        %v281 = vshrl.u32 %v280, 7
        %v282 = vsub.s32 %v279, %v281
        %v283 = vrot.slane %v275, %v282
        %v285 = vunpack.c.l.s4 1983009808
        %v286 = vunpack.c.0.s8 %v285
        %v287 = vlaneseq
        %v288 = vshrl.u32 %v287, 7
        %v289 = vsub.s32 %v286, %v288
        %v290 = vrot.slane %v276, %v289
        %v291 = vcombine.low %v220, %v232
        %v292 = vcombine.high %v220, %v232
        %v294 = vunpack.c.l.s4 1983009808
        %v295 = vunpack.c.0.s8 %v294
        %v296 = vlaneseq
        %v297 = vshrl.u32 %v296, 7
        %v298 = vsub.s32 %v295, %v297
        %v299 = vrot.slane %v291, %v298
        %v301 = vunpack.c.l.s4 1983009808
        %v302 = vunpack.c.0.s8 %v301
        %v303 = vlaneseq
        %v304 = vshrl.u32 %v303, 7
        %v305 = vsub.s32 %v302, %v304
        %v306 = vrot.slane %v292, %v305
        %v307 = vcombine.low %v251, %v267
        %v308 = vcombine.high %v251, %v267
        %v310 = vunpack.c.l.s4 1934713408
        %v311 = vunpack.c.0.s8 %v310
        %v312 = vlaneseq
        %v313 = vshrl.u32 %v312, 7
        %v314 = vsub.s32 %v311, %v313
        %v315 = vrot.slane %v307, %v314
        %v317 = vunpack.c.l.s4 1934713408
        %v318 = vunpack.c.0.s8 %v317
        %v319 = vlaneseq
        %v320 = vshrl.u32 %v319, 7
        %v321 = vsub.s32 %v318, %v320
        %v322 = vrot.slane %v308, %v321
        %v323 = vcombine.low %v258, %v274
        %v325 = vunpack.c.l.s4 1934713408
        %v326 = vunpack.c.0.s8 %v325
        %v327 = vlaneseq
        %v328 = vshrl.u32 %v327, 7
        %v329 = vsub.s32 %v326, %v328
        %v330 = vrot.slane %v323, %v329
        %v331 = vcombine.low %v283, %v299
        %v332 = vcombine.high %v283, %v299
        %v334 = vunpack.c.l.s4 1934713408
        %v335 = vunpack.c.0.s8 %v334
        %v336 = vlaneseq
        %v337 = vshrl.u32 %v336, 7
        %v338 = vsub.s32 %v335, %v337
        %v339 = vrot.slane %v331, %v338
        %v341 = vunpack.c.l.s4 1934713408
        %v342 = vunpack.c.0.s8 %v341
        %v343 = vlaneseq
        %v344 = vshrl.u32 %v343, 7
        %v345 = vsub.s32 %v342, %v344
        %v346 = vrot.slane %v332, %v345
        %v347 = vcombine.low %v290, %v306
        %v349 = vunpack.c.l.s4 1934713408
        %v350 = vunpack.c.0.s8 %v349
        %v351 = vlaneseq
        %v352 = vshrl.u32 %v351, 7
        %v353 = vsub.s32 %v350, %v352
        %v354 = vrot.slane %v347, %v353
        %v355 = vcombine.low %v315, %v339
        %v356 = vcombine.high %v315, %v339
        %v357 = vcombine.low %v322, %v346
        %v358 = vcombine.high %v322, %v346
        %v359 = vcombine.low %v330, %v354
        %v360 = vcombine.low %v193, %v205
        %v361 = vcombine.high %v193, %v205
        %v363 = vunpack.c.l.s4 1983009808
        %v364 = vunpack.c.0.s8 %v363
        %v365 = vlaneseq
        %v366 = vshrl.u32 %v365, 7
        %v367 = vsub.s32 %v364, %v366
        %v368 = vrot.slane %v360, %v367
        %v370 = vunpack.c.l.s4 1983009808
        %v371 = vunpack.c.0.s8 %v370
        %v372 = vlaneseq
        %v373 = vshrl.u32 %v372, 7
        %v374 = vsub.s32 %v371, %v373
        %v375 = vrot.slane %v361, %v374
        %v376 = vcombine.low %v199, %v211
        %v377 = vcombine.high %v199, %v211
        %v379 = vunpack.c.l.s4 1983009808
        %v380 = vunpack.c.0.s8 %v379
        %v381 = vlaneseq
        %v382 = vshrl.u32 %v381, 7
        %v383 = vsub.s32 %v380, %v382
        %v384 = vrot.slane %v376, %v383
        %v386 = vunpack.c.l.s4 1983009808
        %v387 = vunpack.c.0.s8 %v386
        %v388 = vlaneseq
        %v389 = vshrl.u32 %v388, 7
        %v390 = vsub.s32 %v387, %v389
        %v391 = vrot.slane %v377, %v390
        %v392 = vcombine.low %v217, %v229
        %v393 = vcombine.high %v217, %v229
        %v395 = vunpack.c.l.s4 1983009808
        %v396 = vunpack.c.0.s8 %v395
        %v397 = vlaneseq
        %v398 = vshrl.u32 %v397, 7
        %v399 = vsub.s32 %v396, %v398
        %v400 = vrot.slane %v392, %v399
        %v402 = vunpack.c.l.s4 1983009808
        %v403 = vunpack.c.0.s8 %v402
        %v404 = vlaneseq
        %v405 = vshrl.u32 %v404, 7
        %v406 = vsub.s32 %v403, %v405
        %v407 = vrot.slane %v393, %v406
        %v408 = vcombine.low %v223, %v235
        %v409 = vcombine.high %v223, %v235
        %v411 = vunpack.c.l.s4 1983009808
        %v412 = vunpack.c.0.s8 %v411
        %v413 = vlaneseq
        %v414 = vshrl.u32 %v413, 7
        %v415 = vsub.s32 %v412, %v414
        %v416 = vrot.slane %v408, %v415
        %v418 = vunpack.c.l.s4 1983009808
        %v419 = vunpack.c.0.s8 %v418
        %v420 = vlaneseq
        %v421 = vshrl.u32 %v420, 7
        %v422 = vsub.s32 %v419, %v421
        %v423 = vrot.slane %v409, %v422
        %v424 = vcombine.low %v368, %v384
        %v425 = vcombine.high %v368, %v384
        %v427 = vunpack.c.l.s4 1934713408
        %v428 = vunpack.c.0.s8 %v427
        %v429 = vlaneseq
        %v430 = vshrl.u32 %v429, 7
        %v431 = vsub.s32 %v428, %v430
        %v432 = vrot.slane %v424, %v431
        %v434 = vunpack.c.l.s4 1934713408
        %v435 = vunpack.c.0.s8 %v434
        %v436 = vlaneseq
        %v437 = vshrl.u32 %v436, 7
        %v438 = vsub.s32 %v435, %v437
        %v439 = vrot.slane %v425, %v438
        %v440 = vcombine.low %v375, %v391
        %v442 = vunpack.c.l.s4 1934713408
        %v443 = vunpack.c.0.s8 %v442
        %v444 = vlaneseq
        %v445 = vshrl.u32 %v444, 7
        %v446 = vsub.s32 %v443, %v445
        %v447 = vrot.slane %v440, %v446
        %v448 = vcombine.low %v400, %v416
        %v449 = vcombine.high %v400, %v416
        %v451 = vunpack.c.l.s4 1934713408
        %v452 = vunpack.c.0.s8 %v451
        %v453 = vlaneseq
        %v454 = vshrl.u32 %v453, 7
        %v455 = vsub.s32 %v452, %v454
        %v456 = vrot.slane %v448, %v455
        %v458 = vunpack.c.l.s4 1934713408
        %v459 = vunpack.c.0.s8 %v458
        %v460 = vlaneseq
        %v461 = vshrl.u32 %v460, 7
        %v462 = vsub.s32 %v459, %v461
        %v463 = vrot.slane %v449, %v462
        %v464 = vcombine.low %v407, %v423
        %v466 = vunpack.c.l.s4 1934713408
        %v467 = vunpack.c.0.s8 %v466
        %v468 = vlaneseq
        %v469 = vshrl.u32 %v468, 7
        %v470 = vsub.s32 %v467, %v469
        %v471 = vrot.slane %v464, %v470
        %v472 = vcombine.low %v432, %v456
        %v473 = vcombine.high %v432, %v456
        %v474 = vcombine.low %v439, %v463
        %v475 = vcombine.high %v439, %v463
        %v476 = vcombine.low %v447, %v471
        %v478 = vunpack.c.l.s4 1983009808
        %v479 = vunpack.c.0.s8 %v478
        %v480 = vlaneseq
        %v481 = vshrl.u32 %v480, 7
        %v482 = vsub.s32 %v479, %v481
        %v483 = vrot.slane %v238, %v482
        %v484 = vcombine.high %v483, 0
        %v486 = vunpack.c.l.s4 1934713408
        %v487 = vunpack.c.0.s8 %v486
        %v488 = vlaneseq
        %v489 = vshrl.u32 %v488, 7
        %v490 = vsub.s32 %v487, %v489
        %v491 = vrot.slane %v483, %v490
        %v493 = vunpack.c.l.s4 1934713408
        %v494 = vunpack.c.0.s8 %v493
        %v495 = vlaneseq
        %v496 = vshrl.u32 %v495, 7
        %v497 = vsub.s32 %v494, %v496
        %v498 = vrot.slane %v484, %v497
        %v499 = vcombine.high %v491, 0
        %v500 = vcombine.high %v498, 0
        %v501 = vcombine.high %v238, 0
        %v503 = vunpack.c.l.s4 1983009808
        %v504 = vunpack.c.0.s8 %v503
        %v505 = vlaneseq
        %v506 = vshrl.u32 %v505, 7
        %v507 = vsub.s32 %v504, %v506
        %v508 = vrot.slane %v241, %v507
        %v509 = vcombine.high %v508, 0
        %v511 = vunpack.c.l.s4 1934713408
        %v512 = vunpack.c.0.s8 %v511
        %v513 = vlaneseq
        %v514 = vshrl.u32 %v513, 7
        %v515 = vsub.s32 %v512, %v514
        %v516 = vrot.slane %v508, %v515
        %v518 = vunpack.c.l.s4 1934713408
        %v519 = vunpack.c.0.s8 %v518
        %v520 = vlaneseq
        %v521 = vshrl.u32 %v520, 7
        %v522 = vsub.s32 %v519, %v521
        %v523 = vrot.slane %v509, %v522
        %v524 = vcombine.high %v516, 0
        %v525 = vcombine.high %v523, 0
        %v526 = vcombine.high %v241, 0
        %v529 = vpack.i.b16 %v472, %v355
        %v530 = vshrl.u32 %v355, 16
        %v531 = vshrl.u32 %v472, 16
        %v532 = vpack.i.b16 %v531, %v530
        %v535 = vpack.i.b16 %v473, %v356
        %v536 = vshrl.u32 %v356, 16
        %v537 = vshrl.u32 %v473, 16
        %v538 = vpack.i.b16 %v537, %v536
        %v541 = vpack.i.b16 %v474, %v357
        %v542 = vshrl.u32 %v357, 16
        %v543 = vshrl.u32 %v474, 16
        %v544 = vpack.i.b16 %v543, %v542
        %v547 = vpack.i.b16 %v475, %v358
        %v548 = vshrl.u32 %v358, 16
        %v549 = vshrl.u32 %v475, 16
        %v550 = vpack.i.b16 %v549, %v548
        %v553 = vpack.i.b16 %v476, %v359
        %v554 = vshrl.u32 %v359, 16
        %v555 = vshrl.u32 %v476, 16
        %v556 = vpack.i.b16 %v555, %v554
        %v559 = vpack.i.b16 %v516, %v491
        %v560 = vshrl.u32 %v491, 16
        %v561 = vshrl.u32 %v516, 16
        %v562 = vpack.i.b16 %v561, %v560
        %v565 = vpack.i.b16 %v524, %v499
        %v566 = vshrl.u32 %v499, 16
        %v567 = vshrl.u32 %v524, 16
        %v568 = vpack.i.b16 %v567, %v566
        %v571 = vpack.i.b16 %v523, %v498
        %v572 = vshrl.u32 %v498, 16
        %v573 = vshrl.u32 %v523, 16
        %v574 = vpack.i.b16 %v573, %v572
        %v577 = vpack.i.b16 %v525, %v500
        %v578 = vshrl.u32 %v500, 16
        %v579 = vshrl.u32 %v525, 16
        %v580 = vpack.i.b16 %v579, %v578
        %v583 = vpack.i.b16 %v526, %v501
        %v584 = vshrl.u32 %v501, 16
        %v585 = vshrl.u32 %v526, 16
        %v586 = vpack.i.b16 %v585, %v584
        %vm587 = vsmask.f32 7424
        %v589 = vshrl.u32 %v529, 16
        %v591 = vshll.u32 %v529, 16
        %v593 = vrot.slane %v591, 1
        %v594 = vor.u32 %v589, %v593
        %v596 = vshll.u32 %v559, 16
        %v598 = vrot.slane %v596, 1
        %v599 = vsel %vm587, %v594, %v598
        %v601 = vshrl.u32 %v532, 16
        %v603 = vshll.u32 %v532, 16
        %v605 = vrot.slane %v603, 1
        %v606 = vor.u32 %v601, %v605
        %v608 = vshll.u32 %v562, 16
        %v610 = vrot.slane %v608, 1
        %v611 = vsel %vm587, %v606, %v610
        %v613 = vshrl.u32 %v535, 16
        %v615 = vshll.u32 %v535, 16
        %v617 = vrot.slane %v615, 1
        %v618 = vor.u32 %v613, %v617
        %v620 = vshll.u32 %v565, 16
        %v622 = vrot.slane %v620, 1
        %v623 = vsel %vm587, %v618, %v622
        %v625 = vshrl.u32 %v538, 16
        %v627 = vshll.u32 %v538, 16
        %v629 = vrot.slane %v627, 1
        %v630 = vor.u32 %v625, %v629
        %v632 = vshll.u32 %v568, 16
        %v634 = vrot.slane %v632, 1
        %v635 = vsel %vm587, %v630, %v634
        %v637 = vshrl.u32 %v541, 16
        %v639 = vshll.u32 %v541, 16
        %v641 = vrot.slane %v639, 1
        %v642 = vor.u32 %v637, %v641
        %v644 = vshll.u32 %v571, 16
        %v646 = vrot.slane %v644, 1
        %v647 = vsel %vm587, %v642, %v646
        %v649 = vshrl.u32 %v544, 16
        %v651 = vshll.u32 %v544, 16
        %v653 = vrot.slane %v651, 1
        %v654 = vor.u32 %v649, %v653
        %v656 = vshll.u32 %v574, 16
        %v658 = vrot.slane %v656, 1
        %v659 = vsel %vm587, %v654, %v658
        %v661 = vshrl.u32 %v547, 16
        %v663 = vshll.u32 %v547, 16
        %v665 = vrot.slane %v663, 1
        %v666 = vor.u32 %v661, %v665
        %v668 = vshll.u32 %v577, 16
        %v670 = vrot.slane %v668, 1
        %v671 = vsel %vm587, %v666, %v670
        %v673 = vshrl.u32 %v550, 16
        %v675 = vshll.u32 %v550, 16
        %v677 = vrot.slane %v675, 1
        %v678 = vor.u32 %v673, %v677
        %v680 = vshll.u32 %v580, 16
        %v682 = vrot.slane %v680, 1
        %v683 = vsel %vm587, %v678, %v682
        %684 = vrot.lane.b32.xlu0 %v599, 4
        %v685 = vpop.permute.xlu0 %684
        %686 = vrot.lane.b32.xlu0 %v611, 4
        %v687 = vpop.permute.xlu0 %686
        %688 = vrot.lane.b32.xlu0 %v623, 4
        %v689 = vpop.permute.xlu0 %688
        %690 = vrot.lane.b32.xlu0 %v635, 4
        %v691 = vpop.permute.xlu0 %690
        %692 = vrot.lane.b32.xlu0 %v647, 4
        %v693 = vpop.permute.xlu0 %692
        %694 = vrot.lane.b32.xlu0 %v659, 4
        %v695 = vpop.permute.xlu0 %694
        %696 = vrot.lane.b32.xlu0 %v671, 4
        %v697 = vpop.permute.xlu0 %696
        %698 = vrot.lane.b32.xlu0 %v683, 4
        %v699 = vpop.permute.xlu0 %698
        %vm700 = vcmask 1046528
        %v701 = vrot.slane %v529, 1
        %v702 = vrot.slane %v559, 1
        %v703 = vsel %vm700, %v701, %v702
        %v704 = vrot.slane %v532, 1
        %v705 = vrot.slane %v562, 1
        %v706 = vsel %vm700, %v704, %v705
        %v707 = vrot.slane %v535, 1
        %v708 = vrot.slane %v565, 1
        %v709 = vsel %vm700, %v707, %v708
        %v710 = vrot.slane %v538, 1
        %v711 = vrot.slane %v568, 1
        %v712 = vsel %vm700, %v710, %v711
        %v713 = vrot.slane %v541, 1
        %v714 = vrot.slane %v571, 1
        %v715 = vsel %vm700, %v713, %v714
        %v716 = vrot.slane %v544, 1
        %v717 = vrot.slane %v574, 1
        %v718 = vsel %vm700, %v716, %v717
        %v719 = vrot.slane %v547, 1
        %v720 = vrot.slane %v577, 1
        %v721 = vsel %vm700, %v719, %v720
        %v722 = vrot.slane %v550, 1
        %v723 = vrot.slane %v580, 1
        %v724 = vsel %vm700, %v722, %v723
        %725 = vrot.lane.b32.xlu0 %v703, 8
        %v726 = vpop.permute.xlu0 %725
        %727 = vrot.lane.b32.xlu0 %v706, 8
        %v728 = vpop.permute.xlu0 %727
        %729 = vrot.lane.b32.xlu0 %v709, 8
        %v730 = vpop.permute.xlu0 %729
        %731 = vrot.lane.b32.xlu0 %v712, 8
        %v732 = vpop.permute.xlu0 %731
        %733 = vrot.lane.b32.xlu0 %v715, 8
        %v734 = vpop.permute.xlu0 %733
        %735 = vrot.lane.b32.xlu0 %v718, 8
        %v736 = vpop.permute.xlu0 %735
        %737 = vrot.lane.b32.xlu0 %v721, 8
        %v738 = vpop.permute.xlu0 %737
        %739 = vrot.lane.b32.xlu0 %v724, 8
        %v740 = vpop.permute.xlu0 %739
        %741 = vrot.lane.b32.xlu0 %v532, 12
        %v742 = vpop.permute.xlu0 %741
        %743 = vrot.lane.b32.xlu0 %v535, 12
        %v744 = vpop.permute.xlu0 %743
        %745 = vrot.lane.b32.xlu0 %v538, 12
        %v746 = vpop.permute.xlu0 %745
        %747 = vrot.lane.b32.xlu0 %v541, 12
        %v748 = vpop.permute.xlu0 %747
        %749 = vrot.lane.b32.xlu0 %v544, 12
        %v750 = vpop.permute.xlu0 %749
        %751 = vrot.lane.b32.xlu0 %v547, 12
        %v752 = vpop.permute.xlu0 %751
        %753 = vrot.lane.b32.xlu0 %v550, 12
        %v754 = vpop.permute.xlu0 %753
        %755 = vrot.lane.b32.xlu0 %v553, 12
        %v756 = vpop.permute.xlu0 %755
        %v758 = vshrl.u32 %v553, 16
        %v760 = vshll.u32 %v553, 16
        %v762 = vrot.slane %v760, 1
        %v763 = vor.u32 %v758, %v762
        %v765 = vshll.u32 %v583, 16
        %v767 = vrot.slane %v765, 1
        %v768 = vsel %vm587, %v763, %v767
        %769 = vrot.lane.b32.xlu0 %v611, 16
        %v770 = vpop.permute.xlu0 %769
        %771 = vrot.lane.b32.xlu0 %v623, 16
        %v772 = vpop.permute.xlu0 %771
        %773 = vrot.lane.b32.xlu0 %v635, 16
        %v774 = vpop.permute.xlu0 %773
        %775 = vrot.lane.b32.xlu0 %v647, 16
        %v776 = vpop.permute.xlu0 %775
        %777 = vrot.lane.b32.xlu0 %v659, 16
        %v778 = vpop.permute.xlu0 %777
        %779 = vrot.lane.b32.xlu0 %v671, 16
        %v780 = vpop.permute.xlu0 %779
        %781 = vrot.lane.b32.xlu0 %v683, 16
        %v782 = vpop.permute.xlu0 %781
        %783 = vrot.lane.b32.xlu0 %v768, 16
        %v784 = vpop.permute.xlu0 %783
        %v785 = vrot.slane %v553, 1
        %v786 = vrot.slane %v583, 1
        %v787 = vsel %vm700, %v785, %v786
        %788 = vrot.lane.b32.xlu0 %v706, 20
        %v789 = vpop.permute.xlu0 %788
        %790 = vrot.lane.b32.xlu0 %v709, 20
        %v791 = vpop.permute.xlu0 %790
        %792 = vrot.lane.b32.xlu0 %v712, 20
        %v793 = vpop.permute.xlu0 %792
        %794 = vrot.lane.b32.xlu0 %v715, 20
        %v795 = vpop.permute.xlu0 %794
        %796 = vrot.lane.b32.xlu0 %v718, 20
        %v797 = vpop.permute.xlu0 %796
        %798 = vrot.lane.b32.xlu0 %v721, 20
        %v799 = vpop.permute.xlu0 %798
        %800 = vrot.lane.b32.xlu0 %v724, 20
        %v801 = vpop.permute.xlu0 %800
        %802 = vrot.lane.b32.xlu0 %v787, 20
        %v803 = vpop.permute.xlu0 %802
        %804 = vrot.lane.b32.xlu0 %v535, 24
        %v805 = vpop.permute.xlu0 %804
        %806 = vrot.lane.b32.xlu0 %v538, 24
        %v807 = vpop.permute.xlu0 %806
        %808 = vrot.lane.b32.xlu0 %v541, 24
        %v809 = vpop.permute.xlu0 %808
        %810 = vrot.lane.b32.xlu0 %v544, 24
        %v811 = vpop.permute.xlu0 %810
        %812 = vrot.lane.b32.xlu0 %v547, 24
        %v813 = vpop.permute.xlu0 %812
        %814 = vrot.lane.b32.xlu0 %v550, 24
        %v815 = vpop.permute.xlu0 %814
        %816 = vrot.lane.b32.xlu0 %v553, 24
        %v817 = vpop.permute.xlu0 %816
        %818 = vrot.lane.b32.xlu0 %v556, 24
        %v819 = vpop.permute.xlu0 %818
        %v821 = vshrl.u32 %v556, 16
        %v823 = vshll.u32 %v556, 16
        %v825 = vrot.slane %v823, 1
        %v826 = vor.u32 %v821, %v825
        %v828 = vshll.u32 %v586, 16
        %v830 = vrot.slane %v828, 1
        %v831 = vsel %vm587, %v826, %v830
        %832 = vrot.lane.b32.xlu0 %v623, 28
        %v833 = vpop.permute.xlu0 %832
        %834 = vrot.lane.b32.xlu0 %v635, 28
        %v835 = vpop.permute.xlu0 %834
        %836 = vrot.lane.b32.xlu0 %v647, 28
        %v837 = vpop.permute.xlu0 %836
        %838 = vrot.lane.b32.xlu0 %v659, 28
        %v839 = vpop.permute.xlu0 %838
        %840 = vrot.lane.b32.xlu0 %v671, 28
        %v841 = vpop.permute.xlu0 %840
        %842 = vrot.lane.b32.xlu0 %v683, 28
        %v843 = vpop.permute.xlu0 %842
        %844 = vrot.lane.b32.xlu0 %v768, 28
        %v845 = vpop.permute.xlu0 %844
        %846 = vrot.lane.b32.xlu0 %v831, 28
        %v847 = vpop.permute.xlu0 %846
        %v848 = vrot.slane %v556, 1
        %v849 = vrot.slane %v586, 1
        %v850 = vsel %vm700, %v848, %v849
        %851 = vrot.lane.b32.xlu0 %v709, 32
        %v852 = vpop.permute.xlu0 %851
        %853 = vrot.lane.b32.xlu0 %v712, 32
        %v854 = vpop.permute.xlu0 %853
        %855 = vrot.lane.b32.xlu0 %v715, 32
        %v856 = vpop.permute.xlu0 %855
        %857 = vrot.lane.b32.xlu0 %v718, 32
        %v858 = vpop.permute.xlu0 %857
        %859 = vrot.lane.b32.xlu0 %v721, 32
        %v860 = vpop.permute.xlu0 %859
        %861 = vrot.lane.b32.xlu0 %v724, 32
        %v862 = vpop.permute.xlu0 %861
        %863 = vrot.lane.b32.xlu0 %v787, 32
        %v864 = vpop.permute.xlu0 %863
        %865 = vrot.lane.b32.xlu0 %v850, 32
        %v866 = vpop.permute.xlu0 %865
        %vm867 = vcmask 31744
        %v869 = vsel %vm867, %v529, %v685
        %v871 = vsel %vm867, %v532, %v687
        %v873 = vsel %vm867, %v535, %v689
        %v875 = vsel %vm867, %v538, %v691
        %v877 = vsel %vm867, %v541, %v693
        %v879 = vsel %vm867, %v544, %v695
        %v881 = vsel %vm867, %v547, %v697
        %v883 = vsel %vm867, %v550, %v699
        %vm884 = vcmask 64512
        %v886 = vsel %vm884, %v869, %v726
        %v888 = vsel %vm884, %v871, %v728
        %v890 = vsel %vm884, %v873, %v730
        %v892 = vsel %vm884, %v875, %v732
        %v894 = vsel %vm884, %v877, %v734
        %v896 = vsel %vm884, %v879, %v736
        %v898 = vsel %vm884, %v881, %v738
        %v900 = vsel %vm884, %v883, %v740
        %vm901 = vcmask 97280
        %v903 = vsel %vm901, %v886, %v742
        %v905 = vsel %vm901, %v888, %v744
        %v907 = vsel %vm901, %v890, %v746
        %v909 = vsel %vm901, %v892, %v748
        %v911 = vsel %vm901, %v894, %v750
        %v913 = vsel %vm901, %v896, %v752
        %v915 = vsel %vm901, %v898, %v754
        %v917 = vsel %vm901, %v900, %v756
        %vm918 = vcmask 130048
        %v920 = vsel %vm918, %v903, %v770
        %v922 = vsel %vm918, %v905, %v772
        %v924 = vsel %vm918, %v907, %v774
        %v926 = vsel %vm918, %v909, %v776
        %v928 = vsel %vm918, %v911, %v778
        %v930 = vsel %vm918, %v913, %v780
        %v932 = vsel %vm918, %v915, %v782
        %v934 = vsel %vm918, %v917, %v784
        %vm935 = vcmask 162816
        %v937 = vsel %vm935, %v920, %v789
        %v939 = vsel %vm935, %v922, %v791
        %v941 = vsel %vm935, %v924, %v793
        %v943 = vsel %vm935, %v926, %v795
        %v945 = vsel %vm935, %v928, %v797
        %v947 = vsel %vm935, %v930, %v799
        %v949 = vsel %vm935, %v932, %v801
        %v951 = vsel %vm935, %v934, %v803
        %vm952 = vcmask 195584
        %v954 = vsel %vm952, %v937, %v805
        %v956 = vsel %vm952, %v939, %v807
        %v958 = vsel %vm952, %v941, %v809
        %v960 = vsel %vm952, %v943, %v811
        %v962 = vsel %vm952, %v945, %v813
        %v964 = vsel %vm952, %v947, %v815
        %v966 = vsel %vm952, %v949, %v817
        %v968 = vsel %vm952, %v951, %v819
        %vm969 = vcmask 228352
        %v971 = vsel %vm969, %v954, %v833
        %v973 = vsel %vm969, %v956, %v835
        %v975 = vsel %vm969, %v958, %v837
        %v977 = vsel %vm969, %v960, %v839
        %v979 = vsel %vm969, %v962, %v841
        %v981 = vsel %vm969, %v964, %v843
        %v983 = vsel %vm969, %v966, %v845
        %v985 = vsel %vm969, %v968, %v847
        %vm986 = vcmask 261120
        %v988 = vsel %vm986, %v971, %v852
        %v990 = vsel %vm986, %v973, %v854
        %v992 = vsel %vm986, %v975, %v856
        %v994 = vsel %vm986, %v977, %v858
        %v996 = vsel %vm986, %v979, %v860
        %v998 = vsel %vm986, %v981, %v862
        %v1000 = vsel %vm986, %v983, %v864
        %v1002 = vsel %vm986, %v985, %v866
        %1004 = vset.pattern.permute.xlu0 0
        %1005 = vperm.xlu0 %1004, %v185
        %v1006 = vpop.permute.xlu0 %1005
        %vm1008 = vcmask 293888
        %v1010 = vsel %vm1008, %v184, 0
        %v1012 = vsel %vm1008, %v988, 0
        %v1014 = vsel %vm1008, %v990, 0
        %v1016 = vsel %vm1008, %v992, 0
        %v1018 = vsel %vm1008, %v994, 0
        %v1020 = vsel %vm1008, %v996, 0
        %v1022 = vsel %vm1008, %v998, 0
        %v1024 = vsel %vm1008, %v1000, 0
        %v1026 = vsel %vm1008, %v1002, 0
        %1028 = vmatprep.subr.bf16.mxu0 0
        %1029 = vmatpush1.bf16.xpose.msra.mxu0 %v1026
        %1030 = vmatprep.subr.bf16.mxu0 0
        %1031 = vmatpush1.bf16.xpose.msra.mxu0 %v1024
        %1032 = vmatprep.subr.bf16.mxu0 0
        %1033 = vmatpush1.bf16.xpose.msra.mxu0 %v1022
        %1034 = vmatprep.subr.bf16.mxu0 0
        %1035 = vmatpush1.bf16.xpose.msra.mxu0 %v1020
        %1036 = vmatprep.subr.bf16.mxu0 0
        %1037 = vmatpush1.bf16.xpose.msra.mxu0 %v1018
        %1038 = vmatprep.subr.bf16.mxu0 0
        %1039 = vmatpush1.bf16.xpose.msra.mxu0 %v1016
        %1040 = vmatprep.subr.bf16.mxu0 0
        %1041 = vmatpush1.bf16.xpose.msra.mxu0 %v1014
        %1042 = vmatprep.subr.bf16.mxu0 0
        %1043 = vmatpush1.bf16.xpose.msra.mxu0 %v1012
        %1044 = vmatprep.subr.bf16.mxu0 0
        %1045 = vmatpush2.bf16.xpose.msra.mxu0 0
        %1046 = vmatprep.subr.bf16.mxu0 0
        %1047 = vmatpush2.bf16.xpose.msra.mxu0 0
        %1048 = vmatprep.subr.bf16.mxu0 0
        %1049 = vmatpush2.bf16.xpose.msra.mxu0 0
        %1050 = vmatprep.subr.bf16.mxu0 0
        %1051 = vmatpush2.bf16.xpose.msra.mxu0 0
        %1052 = vmatprep.subr.bf16.mxu0 0
        %1053 = vmatpush2.bf16.xpose.msra.mxu0 0
        %1054 = vmatprep.subr.bf16.mxu0 0
        %1055 = vmatpush2.bf16.xpose.msra.mxu0 0
        %1056 = vmatprep.subr.bf16.mxu0 0
        %1057 = vmatpush2.bf16.xpose.msra.mxu0 0
        %1058 = vmatprep.subr.bf16.mxu0 0
        %1059 = vmatpush2.bf16.xpose.msra.mxu0 0
        %1060 = vmatprep.mubr.bf16.mxu0 0
        %1061 = vmatmul.mubr.bf16.gmra.mxu0 %v1010
        %v1062 = vpop.f32.mrf.mxu0
        %v1063 = vadd.f32 %v1006, %v1062
        %v1064 = vpop.f32.mrf.mxu0
        %v1065 = vpop.f32.mrf.mxu0
        %v1066 = vpop.f32.mrf.mxu0
        %1067 = vdwg.mxu0
        %v1068 = vmax.f32 %v1063, 0.0
        %1069 = vst [vmem:[%s177] sm:$0xff] %v1068
        %s1070 = sand.u32 %s107, 1
        %s1071 = scalar_lea.sflag [#allocation3], %s1070
        %s1072 = sand.u32 %s107, 1
        %s1073 = smul.addr %s1072, 8
        %s1074 = scalar_lea.vmem [#allocation2], %s1073
        // Predicated region
        $region33: #{tpu_custom_call.1} parent=31 // pred_check
          %p1075 = pneg %p117
        $region34: #{tpu_custom_call.1} parent=31 // pred_check_branch
          %1077 = sbr.rel (%p1075) target = $region36
        $region35: #{tpu_custom_call.1} parent=31 // pred_region
          %s1079 = ssub.s32 128, 128
          %1080 = vsyncadd %s1071, %s1079
          %s1081 = smul.addr %s21, 2
          %s1082 = sadd.s32 %s22, %s1081
          %s1083 = smul.addr %s1082, 128
          %s1084 = scalar_lea.hbm %s3, %s1083
          %s1086 = sshll.u32 %s1074, 4
          %s1087 = int_to_ptr.vmem [resolvable:$true] %s1086
          %1089 = dma.vmem_to_hbm [thread:$0]  %s1087, 128, %s1084, %s1071
        $region36: #{tpu_custom_call.1} parent=31 // pred_fallthru
          _
      $region32: #{tpu_custom_call.1} parent=5 // pred_fallthru
        _
      %p1090 = scmp.le.s32.totalorder 2, %s12
      // Predicated region
      $region37: #{tpu_custom_call.1} parent=5 // pred_check
        %p1091 = pneg %p1090
      $region38: #{tpu_custom_call.1} parent=5 // pred_check_branch
        %1093 = sbr.rel (%p1091) target = $region40
      $region39: #{tpu_custom_call.1} parent=5 // pred_region
        %s1094 = ssub.s32 %s12, 2
        // Predicated region
        $region41: #{tpu_custom_call.1} parent=39 // pred_check
          %p1095 = pneg %p123
        $region42: #{tpu_custom_call.1} parent=39 // pred_check_branch
          %1097 = sbr.rel (%p1095) target = $region44
        $region43: #{tpu_custom_call.1} parent=39 // pred_region
          %s1098 = sand.u32 %s108, 1
          %s1099 = scalar_lea.sflag [#allocation3], %s1098
          %s1100 = sand.u32 %s108, 1
          %s1101 = smul.addr %s1100, 8
          %s1102 = scalar_lea.vmem [#allocation2], %s1101
          %1103 = dma.done %s1099, 128
        $region44: #{tpu_custom_call.1} parent=39 // pred_fallthru
          _
      $region40: #{tpu_custom_call.1} parent=5 // pred_fallthru
        _
    $region6: #{tpu_custom_call.1} parent=1 // loop_footer
      %s16 = sadd.s32 1, %s12
    $region7: #{tpu_custom_call.1} parent=1 // loop_footer_branch
      %11 = sbr.rel target = $region3
    $region8: #{tpu_custom_call.1} parent=1 // loop_exit
      _
    %1104 = vsyncpa [#allocation3], 1
    %s1105 = scalar_lea.sflag [#allocation3], 1
    %1106 = vsyncpa %s1105, 1

</llo_original>
